<compile_context>
chip_gen: v5e
topology: v5e:2x2
jax: 0.10.0
libtpu: 0.0.40
codegen_flags: <defaults>
</compile_context>

<pallas_src>
import functools
import math

import jax
import jax.numpy as jnp
from jax import lax
from jax.experimental import pallas as pl
from jax.experimental.pallas import tpu as pltpu

_LANE = 128


def _tpu_vmem_capacity_bytes():
    try:
        cap = int(getattr(pltpu.get_tpu_info(), "vmem_capacity_bytes"))
        if cap > 0:
            return cap
    except Exception:
        pass
    return 64 * 1024 * 1024          # conservative default (v7x per-core VMEM)


_VMEM_CAP = _tpu_vmem_capacity_bytes()
_BIG_VMEM = _VMEM_CAP >= 96 * 1024 * 1024                      # v5e/v6e: 128 MiB; v7x: 64 MiB
_VMEM_LIMIT = min((96 if _BIG_VMEM else 48) * 1024 * 1024, (3 * _VMEM_CAP) // 4)


def _sublane_multiple(dtype):
    size = jnp.dtype(dtype).itemsize
    if size >= 4:
        return 8
    if size == 2:
        return 16
    return 32


def _pick_tile(dim, candidates, multiple=1):
    """Largest candidate that divides `dim` (and is a `multiple`), else the full dim."""
    for c in candidates:
        if c <= dim and dim % c == 0 and c % multiple == 0:
            return c
    return dim


# ---------------------------------------------------------------------------
# Tiled linear:  y = x @ W^T (+ b),  W in torch layout (out_features, in_features)
# ---------------------------------------------------------------------------

def _matmul_1k_kernel(x_ref, w_ref, o_ref):
    o_ref[...] = lax.dot_general(
        x_ref[...], w_ref[...], (((1,), (1,)), ((), ())),
        preferred_element_type=jnp.float32).astype(o_ref.dtype)


def _matmul_bias_1k_kernel(x_ref, w_ref, b_ref, o_ref):
    acc = lax.dot_general(
        x_ref[...], w_ref[...], (((1,), (1,)), ((), ())),
        preferred_element_type=jnp.float32)
    o_ref[...] = (acc + b_ref[...].astype(jnp.float32)).astype(o_ref.dtype)


def _matmul_kernel(x_ref, w_ref, o_ref, acc_ref):
    @pl.when(pl.program_id(2) == 0)
    def _():
        acc_ref[...] = jnp.zeros(acc_ref.shape, acc_ref.dtype)

    acc_ref[...] += lax.dot_general(
        x_ref[...], w_ref[...], (((1,), (1,)), ((), ())),
        preferred_element_type=jnp.float32)

    @pl.when(pl.program_id(2) == pl.num_programs(2) - 1)
    def _():
        o_ref[...] = acc_ref[...].astype(o_ref.dtype)


def _matmul_bias_kernel(x_ref, w_ref, b_ref, o_ref, acc_ref):
    @pl.when(pl.program_id(2) == 0)
    def _():
        acc_ref[...] = jnp.zeros(acc_ref.shape, acc_ref.dtype)

    acc_ref[...] += lax.dot_general(
        x_ref[...], w_ref[...], (((1,), (1,)), ((), ())),
        preferred_element_type=jnp.float32)

    @pl.when(pl.program_id(2) == pl.num_programs(2) - 1)
    def _():
        o_ref[...] = (acc_ref[...] + b_ref[...].astype(jnp.float32)).astype(o_ref.dtype)


def pallas_linear(x2d, w, b=None, *, out_dtype=None, pad_out_lanes=False):
    """x2d: (M, K), w: (N, K) torch layout, b: (N,) or None -> (M, N)."""
    M, K = x2d.shape
    N, K2 = w.shape
    assert K == K2
    out_dtype = out_dtype if out_dtype is not None else x2d.dtype

    orig_n = N
    if pad_out_lanes and N % _LANE != 0:          # lane-dense (unmasked) output stores
        n_pad = ((N + _LANE - 1) // _LANE) * _LANE
        w = jnp.pad(w, ((0, n_pad - N), (0, 0)))
        if b is not None:
            b = jnp.pad(b, (0, n_pad - N))
        N = n_pad

    sub = _sublane_multiple(x2d.dtype)
    tm_cands = (1024, 512, 256, 128, 64, 32, 16, 8)
    tm = _pick_tile(M, tm_cands, multiple=sub)
    tn = _pick_tile(N, (512, 256, 128))
    tk = _pick_tile(K, (512, 256, 128))

    # v7x megacore: keep >= 2 parallel grid steps whenever M allows it.
    if (M // tm) * (N // tn) < 2:
        for c in tm_cands:
            if c < tm and c % sub == 0 and M % c == 0 and M // c >= 2:
                tm = c
                break

    args = [x2d, w]
    if K // tk == 1:
        # single-K specialization: no scratch, no init/finalize branches.
        grid = (M // tm, N // tn)
        in_specs = [pl.BlockSpec((tm, K), lambda i, j: (i, 0)),
                    pl.BlockSpec((tn, K), lambda i, j: (j, 0))]
        out_spec = pl.BlockSpec((tm, tn), lambda i, j: (i, j))
        dims = ("parallel", "parallel")
        scratch = []
        kernel = _matmul_1k_kernel
        if b is not None:
            in_specs.append(pl.BlockSpec((1, tn), lambda i, j: (0, j)))
            args.append(b.reshape(1, N))
            kernel = _matmul_bias_1k_kernel
    else:
        grid = (M // tm, N // tn, K // tk)
        in_specs = [pl.BlockSpec((tm, tk), lambda i, j, k: (i, k)),
                    pl.BlockSpec((tn, tk), lambda i, j, k: (j, k))]
        out_spec = pl.BlockSpec((tm, tn), lambda i, j, k: (i, j))
        dims = ("parallel", "parallel", "arbitrary")
        scratch = [pltpu.VMEM((tm, tn), jnp.float32)]
        kernel = _matmul_kernel
        if b is not None:
            in_specs.append(pl.BlockSpec((1, tn), lambda i, j, k: (0, j)))
            args.append(b.reshape(1, N))
            kernel = _matmul_bias_kernel

    out = pl.pallas_call(
        kernel,
        out_shape=jax.ShapeDtypeStruct((M, N), out_dtype),
        grid_spec=pltpu.PrefetchScalarGridSpec(
            num_scalar_prefetch=0,
            grid=grid,
            in_specs=in_specs,
            out_specs=out_spec,
            scratch_shapes=scratch),
        compiler_params=pltpu.CompilerParams(
            dimension_semantics=dims, vmem_limit_bytes=_VMEM_LIMIT),
    )(*args)

    if N != orig_n:
        out = out[:, :orig_n]
    return out


# ---------------------------------------------------------------------------
# Fused K/V projection that never materializes kv_in in HBM:
#   kv[b] = x[b] @ Wkv[:, :qd]^T + x[(b + B/2) % B] @ Wkv[:, qd:]^T
# ---------------------------------------------------------------------------

def _kv_proj_kernel(xs_ref, xp_ref, wa_ref, wb_ref, o_ref):
    acc = lax.dot_general(xs_ref[...], wa_ref[...], (((1,), (1,)), ((), ())),
                          preferred_element_type=jnp.float32)
    acc = acc + lax.dot_general(xp_ref[...], wb_ref[...], (((1,), (1,)), ((), ())),
                                preferred_element_type=jnp.float32)
    o_ref[...] = acc.astype(o_ref.dtype)


def pallas_kv_projection(x, w_kv, *, out_dtype=None):
    """x: (B, N, qd); w_kv: (2*inner, 2*qd) rows [Wk; Wv] -> (B, N, 2*inner)."""
    B, N, qd = x.shape
    n_out, two_qd = w_kv.shape
    assert two_qd == 2 * qd and B % 2 == 0
    out_dtype = out_dtype if out_dtype is not None else x.dtype
    half = B // 2

    w_a = w_kv[:, :qd]      # columns applied to x[b]        (key_I / value_I first half)
    w_b = w_kv[:, qd:]      # columns applied to x[partner]  (second half of the concat)

    sub = _sublane_multiple(x.dtype)
    tr = _pick_tile(N, (512, 256, 128, 64, 32, 16, 8), multiple=sub)
    tc = _pick_tile(n_out, (512, 256, 128))
    grid = (B, N // tr, n_out // tc)

    return pl.pallas_call(
        _kv_proj_kernel,
        out_shape=jax.ShapeDtypeStruct((B, N, n_out), out_dtype),
        grid_spec=pltpu.PrefetchScalarGridSpec(
            num_scalar_prefetch=0,
            grid=grid,
            in_specs=[
                pl.BlockSpec((pl.Squeezed(), tr, qd), lambda b, i, j: (b, i, 0)),
                pl.BlockSpec((pl.Squeezed(), tr, qd),
                             lambda b, i, j: ((b + half) % B, i, 0)),
                pl.BlockSpec((tc, qd), lambda b, i, j: (j, 0)),
                pl.BlockSpec((tc, qd), lambda b, i, j: (j, 0)),
            ],
            out_specs=pl.BlockSpec((pl.Squeezed(), tr, tc),
                                   lambda b, i, j: (b, i, j))),
        compiler_params=pltpu.CompilerParams(
            dimension_semantics=("parallel", "parallel", "parallel"),
            vmem_limit_bytes=_VMEM_LIMIT),
    )(x, x, w_a, w_b)


# ---------------------------------------------------------------------------
# Flash-style multi-head attention: all heads batched in a single QK^T / PV op.
# q: (B, Nq, heads, dh) view; kv: (B, Nkv, 2, heads, dh) view (0=K, 1=V).
# Output stored lane-dense as (tq, heads*dh).
# ---------------------------------------------------------------------------

def _attention_kernel(q_ref, kv_ref, o_ref, qt_sc, m_sc, l_sc, acc_sc, *, heads):
    kv_step = pl.program_id(2)

    @pl.when(kv_step == 0)
    def _():
        # q relayout (tq, heads, dh) -> (heads, tq, dh) cached once per q tile
        qt_sc[...] = jnp.swapaxes(q_ref[...], 0, 1)
        m_sc[...] = jnp.full(m_sc.shape, -jnp.inf, m_sc.dtype)
        l_sc[...] = jnp.zeros(l_sc.shape, l_sc.dtype)
        acc_sc[...] = jnp.zeros(acc_sc.shape, acc_sc.dtype)

    q_h = qt_sc[...]                              # (heads, tq, dh)
    kv_blk = kv_ref[...]                          # (tkv, 2, heads, dh)
    k_h = jnp.swapaxes(kv_blk[:, 0], 0, 1)        # (heads, tkv, dh)
    v_h = jnp.swapaxes(kv_blk[:, 1], 0, 1)        # (heads, tkv, dh)

    # softmax scale is pre-folded into the Q weights -> no per-step scaling.
    s = jnp.einsum("hqd,hkd->hqk", q_h, k_h,
                   preferred_element_type=jnp.float32)          # (heads, tq, tkv)

    m_prev = m_sc[...]
    m_new = jnp.maximum(m_prev, jnp.max(s, axis=-1, keepdims=True))
    alpha = jnp.exp(m_prev - m_new)
    if q_h.dtype == jnp.bfloat16:
        p = jnp.exp((s - m_new).astype(jnp.bfloat16))           # bf16 EUP on v6e/v7x
    else:
        p = jnp.exp(s - m_new)

    l_sc[...] = alpha * l_sc[...] + jnp.sum(p.astype(jnp.float32),
                                            axis=-1, keepdims=True)
    acc_sc[...] = alpha * acc_sc[...] + jnp.einsum(
        "hqk,hkd->hqd", p.astype(v_h.dtype), v_h,
        preferred_element_type=jnp.float32)
    m_sc[...] = m_new

    @pl.when(kv_step == pl.num_programs(2) - 1)
    def _():
        l = l_sc[...]
        inv = pl.reciprocal(l, approx=True)       # EUP slot (near-free)
        inv = inv * (2.0 - l * inv)               # one Newton step -> ~f32 accurate
        out_h = acc_sc[...] * inv                 # (heads, tq, dh)
        # merge heads back into a single lane-dense (tq, heads*dh) store
        o_ref[...] = jnp.concatenate(
            [out_h[h] for h in range(heads)], axis=-1).astype(o_ref.dtype)


def pallas_attention(q, kv, *, heads, dim_head):
    """q: (B, Nq, inner); kv: (B, Nkv, 2*inner) fused [K|V] -> (B, Nq, inner)."""
    B, Nq, inner = q.shape
    _, Nkv, two_inner = kv.shape
    assert inner == heads * dim_head and two_inner == 2 * inner

    q4 = q.reshape(B, Nq, heads, dim_head)            # free views (no HBM transpose)
    kv5 = kv.reshape(B, Nkv, 2, heads, dim_head)

    tq_cands = (512, 256, 128, 64, 32, 16, 8) if _BIG_VMEM else (256, 128, 64, 32, 16, 8)
    tkv_cands = ((1024, 512, 256, 128, 64, 32, 16, 8) if _BIG_VMEM
                 else (512, 256, 128, 64, 32, 16, 8))
    tq = _pick_tile(Nq, tq_cands, multiple=8)
    tkv = _pick_tile(Nkv, tkv_cands, multiple=8)
    grid = (B, Nq // tq, Nkv // tkv)

    kernel = functools.partial(_attention_kernel, heads=heads)
    # TODO(synk): if kv DMA is exposed on v5e, add pipeline_mode=pl.Buffered(3) on the kv spec.
    return pl.pallas_call(
        kernel,
        out_shape=jax.ShapeDtypeStruct((B, Nq, inner), q.dtype),
        grid_spec=pltpu.PrefetchScalarGridSpec(
            num_scalar_prefetch=0,
            grid=grid,
            in_specs=[
                pl.BlockSpec((pl.Squeezed(), tq, heads, dim_head),
                             lambda b, i, j: (b, i, 0, 0)),
                pl.BlockSpec((pl.Squeezed(), tkv, 2, heads, dim_head),
                             lambda b, i, j: (b, j, 0, 0, 0)),
            ],
            out_specs=pl.BlockSpec((pl.Squeezed(), tq, inner),
                                   lambda b, i, j: (b, i, 0)),
            scratch_shapes=[
                pltpu.VMEM((heads, tq, dim_head), q.dtype),      # cached transposed q
                pltpu.VMEM((heads, tq, 1), jnp.float32),         # m
                pltpu.VMEM((heads, tq, 1), jnp.float32),         # l
                pltpu.VMEM((heads, tq, dim_head), jnp.float32),  # acc
            ]),
        compiler_params=pltpu.CompilerParams(
            dimension_semantics=("parallel", "parallel", "arbitrary"),
            vmem_limit_bytes=_VMEM_LIMIT),
    )(q4, kv5)


# ---------------------------------------------------------------------------
# Module-equivalent forward
# ---------------------------------------------------------------------------

def lidar_image_cross_attention_forward(params, x, context=None, mask=None, *,
                                        heads, dim_head, compute_dtype=None):
    """Mirrors Lidar_Image_CrossAttention.forward (mask=None path, eval dropout)."""
    if mask is not None:
        # TODO(synk): mask path (masked_fill of sim before softmax) not implemented.
        raise NotImplementedError("mask is not supported")
    del context  # torch module computes `context = default(context, x)` but never uses it

    b, n, qd = x.shape
    assert b % 2 == 0, "batch must be even: the module chunks the batch in half"
    inner = heads * dim_head
    ctx_dim = params["to_k_w"].shape[1]
    assert ctx_dim == 2 * qd, "context_dim must equal 2*query_dim for this module"

    out_dtype = x.dtype
    scale = dim_head ** -0.5

    # fold softmax scale into Q weights (free; removes per-step scaling in the kernel)
    w_q = params["to_q_w"] * jnp.asarray(scale, params["to_q_w"].dtype)
    # fused K+V weights: rows [Wk; Wv]; columns split into [self-half | partner-half]
    w_kv = jnp.concatenate([params["to_k_w"], params["to_v_w"]], axis=0)
    w_out = params["to_out_w"]
    b_out = params["to_out_b"]

    if compute_dtype is not None:                 # bf16 MXU/EUP fast path (v6e/v7x)
        x = x.astype(compute_dtype)
        w_q = w_q.astype(compute_dtype)
        w_kv = w_kv.astype(compute_dtype)
        w_out = w_out.astype(compute_dtype)

    # q = to_q(x) (scale pre-folded)
    q = pallas_linear(x.reshape(b * n, qd), w_q).reshape(b, n, inner)

    # fused K+V projection without materializing kv_in in HBM
    kv = pallas_kv_projection(x, w_kv)                               # (b, n, 2*inner)

    # flash attention, all heads batched per tile
    out = pallas_attention(q, kv, heads=heads, dim_head=dim_head)    # (b, n, inner)

    # to_out: Linear(inner, query_dim) + Dropout (identity in eval);
    # output lanes padded to 128 inside pallas_linear and sliced back here.
    out = pallas_linear(out.reshape(b * n, inner), w_out, b_out,
                        out_dtype=out_dtype, pad_out_lanes=True)
    return out.reshape(b, n, qd)


# ---------------------------------------------------------------------------
# Deterministic parameter init, pure-JAX reference, demo
# ---------------------------------------------------------------------------

def init_params(key, query_dim, context_dim, heads, dim_head, dtype=jnp.float32):
    inner = heads * dim_head
    ks = jax.random.split(key, 5)

    def uniform_linear(k, out_f, in_f):
        bound = 1.0 / math.sqrt(in_f)
        return jax.random.uniform(k, (out_f, in_f), dtype, -bound, bound)

    bound_o = 1.0 / math.sqrt(inner)
    return {
        "to_q_w": uniform_linear(ks[0], inner, query_dim),
        "to_k_w": uniform_linear(ks[1], inner, context_dim),
        "to_v_w": uniform_linear(ks[2], inner, context_dim),
        "to_out_w": uniform_linear(ks[3], query_dim, inner),
        "to_out_b": jax.random.uniform(ks[4], (query_dim,), dtype, -bound_o, bound_o),
    }


def reference_forward(params, x, *, heads, dim_head):
    """Pure-JAX mirror of the torch forward (mask=None)."""
    b, n, qd = x.shape
    inner = heads * dim_head
    q = x @ params["to_q_w"].T
    half = b // 2
    x0, x1 = x[:half], x[half:]
    key_I = jnp.concatenate([x0, x1], axis=-1)
    key_L = jnp.concatenate([x1, x0], axis=-1)
    kv_in = jnp.concatenate([key_I, key_L], axis=0)
    k = kv_in @ params["to_k_w"].T
    v = kv_in @ params["to_v_w"].T

    def split_heads(t):   # 'b n (h d) -> (b h) n d'
        return (t.reshape(b, n, heads, dim_head)
                 .transpose(0, 2, 1, 3)
                 .reshape(b * heads, n, dim_head))

    qh, kh, vh = split_heads(q), split_heads(k), split_heads(v)
    sim = jnp.einsum("bid,bjd->bij", qh, kh,
                     precision=lax.Precision.HIGHEST) * (dim_head ** -0.5)
    attn = jax.nn.softmax(sim, axis=-1)
    out = jnp.einsum("bij,bjd->bid", attn, vh, precision=lax.Precision.HIGHEST)
    out = (out.reshape(b, heads, n, dim_head)
              .transpose(0, 2, 1, 3)
              .reshape(b, n, inner))
    return out @ params["to_out_w"].T + params["to_out_b"]


if __name__ == "__main__":
    # Small shapes consistent with the module (batch must be even; context_dim == 2*query_dim).
    B = 2
    heads = 4
    dim_head = 32           # inner = 128 (lane-dense attention output)
    query_dim = 64
    context_dim = 2 * query_dim
    seq = 64

    key = jax.random.PRNGKey(0)
    kx, kp = jax.random.split(key)
    x = jax.random.normal(kx, (B, seq, query_dim), jnp.float32)
    params = init_params(kp, query_dim, context_dim, heads, dim_head)

    fwd = functools.partial(lidar_image_cross_attention_forward,
                            heads=heads, dim_head=dim_head)

    ref = reference_forward(params, x, heads=heads, dim_head=dim_head)

    # f32 path
    out = jax.block_until_ready(fwd(params, x))
    assert out.shape == (B, seq, query_dim)
    err = float(jnp.max(jnp.abs(out - ref)))
    assert jnp.allclose(out, ref, atol=2e-2, rtol=2e-2), f"f32 max abs err {err}"

    # bf16 MXU/EUP path (v6e/v7x fast path); f32 accumulation inside kernels
    out_bf16 = jax.block_until_ready(fwd(params, x, compute_dtype=jnp.bfloat16))
    err_bf16 = float(jnp.max(jnp.abs(out_bf16.astype(jnp.float32) - ref)))
    assert err_bf16 < 5e-2, f"bf16 max abs err {err_bf16}"

    print("KERNEL_OK")
</pallas_src>

<mosaic_0001>
module attributes {stable_mosaic.version = 11 : i64} {
  func.func @_matmul_1k_kernel(%arg0: i32, %arg1: i32, %arg2: memref<64x64xf32, #tpu.memory_space<vmem>>, %arg3: memref<128x64xf32, #tpu.memory_space<vmem>>, %arg4: memref<64x128xf32, #tpu.memory_space<vmem>>) attributes {dimension_semantics = [#tpu.dimension_semantics<parallel>, #tpu.dimension_semantics<parallel>], iteration_bounds = array<i64: 2, 1>, scalar_prefetch = 0 : i64, scratch_operands = 0 : i64, tpu.core_type = #tpu.core_type<tc>, window_params = [{transform_indices = @transform_0, window_bounds = array<i64: 64, 64>}, {transform_indices = @transform_1, window_bounds = array<i64: 128, 64>}, {transform_indices = @transform_2, window_bounds = array<i64: 64, 128>}]} {
    %c0 = arith.constant 0 : index
    %c0_0 = arith.constant 0 : index
    %0 = vector.load %arg2[%c0, %c0_0] : memref<64x64xf32, #tpu.memory_space<vmem>>, vector<64x64xf32>
    %c0_1 = arith.constant 0 : index
    %c0_2 = arith.constant 0 : index
    %1 = vector.load %arg3[%c0_1, %c0_2] : memref<128x64xf32, #tpu.memory_space<vmem>>, vector<128x64xf32>
    %cst = arith.constant dense<0.000000e+00> : vector<64x128xf32>
    %2 = tpu.matmul %0, %1, %cst {dimension_numbers = #tpu.dot_dimension_numbers<[1], [1], [0], [0], [0, 0, 1, 0], [], []>} : vector<64x64xf32>, vector<128x64xf32>, vector<64x128xf32> -> vector<64x128xf32>
    %c0_3 = arith.constant 0 : index
    %c0_4 = arith.constant 0 : index
    %3 = vector.load %arg4[%c0_3, %c0_4] : memref<64x128xf32, #tpu.memory_space<vmem>>, vector<64x128xf32>
    tpu.vector_store %arg4[%c0_3, %c0_4], %2 {strides = array<i32>} : memref<64x128xf32, #tpu.memory_space<vmem>>, vector<64x128xf32>,
    return
  }
  func.func @transform_0(%arg0: i32, %arg1: i32) -> (i32, i32) {
    %c0_i32 = arith.constant 0 : i32
    %c0_i32_0 = arith.constant 0 : i32
    return %arg0, %c0_i32 : i32, i32
  }
  func.func @transform_1(%arg0: i32, %arg1: i32) -> (i32, i32) {
    %c0_i32 = arith.constant 0 : i32
    %c0_i32_0 = arith.constant 0 : i32
    return %arg1, %c0_i32 : i32, i32
  }
  func.func @transform_2(%arg0: i32, %arg1: i32) -> (i32, i32) {
    %c0_i32 = arith.constant 0 : i32
    return %arg0, %arg1 : i32, i32
  }
}

</mosaic_0001>

<llo_original>
// kernel: tpu_custom_call.1
$region0: #{tpu_custom_call.1}
  #allocation0 [shape = 'u32[]', space=smem, size = 0x4, offset = 0x4, fixed_abs, tag = 'smem constant byte address 0x4 - core index']
  #allocation1 [shape = 'u32[72,128]{1,0:T(1,128)}', space=vmem, size = 0x9000, scoped, tag = 'internal scratch']
  %s0 = inlined_call_operand.vmem [shape: f32[128,64], index: 0, kind: input, shape index: {}]
  %s1 = inlined_call_operand.vmem [shape: f32[128,64], index: 1, kind: input, shape index: {}]
  %s2 = inlined_call_operand.hbm [shape: f32[128,128], index: 2, kind: output, shape index: {}]
  %s3 = sld [smem:[#allocation0]]
  $region41: #{tpu_custom_call.1} parent=0
    _
  %s5 = ssub.s32 1, %s3
  %s6 = scalar_select 0, %s5, %s3
  $region1: #{tpu_custom_call.1} parent=0
    #allocation2 [shape = 'u8[65536]{0}', space=vmem, size = 0x10000, scoped, tag = 'output window, operand 0']
    #allocation3 [shape = 's32[2]{0}', space=sflag, size = 0x8, scoped, tag = 'scoped memory for tpu_custom_call.1']
    %7 = vsyncpa [#allocation3], 0
    %s8 = scalar_lea.sflag [#allocation3], 1
    %9 = vsyncpa %s8, 0
    loop: start=0, step=1, limit=4
    $region2: #{tpu_custom_call.1} parent=1 // loop_pre_header
      _
    $region3: #{tpu_custom_call.1} parent=1 // loop_header
      %s11 = sphi 0, %s15
      %p12 = scmp.ge.s32.totalorder %s11, 4
      %s18 = sphi 0, %s30
      %s19 = sphi 0, %s26
      %s20 = sphi 0, %s18
      %s21 = sphi 0, %s19
      %s22 = sphi 0, %s20
      %s23 = sphi 0, %s21
      %s33 = sphi 0, %s35
      %s36 = sphi 0, %s33
      %s37 = sphi 0, %s36
      %s53 = sphi 0, %s37
      %s59 = sphi 0, %s61
      %s62 = sphi 0, %s59
      %s63 = sphi 0, %s62
      %s79 = sphi 0, %s63
      %s87 = sphi 0, %s89
      %s90 = sphi 0, %s87
      %s91 = sphi 0, %s90
      %s107 = sphi 0, %s91
    $region4: #{tpu_custom_call.1} parent=1 // loop_header_branch
      %14 = sbr.rel (%p12) target = $region8
    $region5: #{tpu_custom_call.1} parent=1 // loop_body
      %s16 = ssub.s32 %s11, 1
      %s17 = ssub.s32 %s11, 2
      %s24 = sadd.s32 1, %s19
      %p25 = scmp.ge.s32.totalorder %s24, 1
      %s26 = scalar_select %p25, 0, %s24
      %s27 = sadd.s32 1, %s18
      %s28 = scalar_select %p25, %s27, %s18
      %p29 = scmp.ge.s32.totalorder %s28, 2
      %s30 = scalar_select %p29, 0, %s28
      %s31 = ssub.s32 %s18, %s30
      %p32 = scmp.eq.s32.totalorder %s31, 0
      %s34 = sadd.s32 %s33, 1
      %s35 = scalar_select %p32, %s33, %s34
      %p38 = pneg %p32
      %p39 = scmp.eq.s32.totalorder %s11, 1
      %p40 = por %p38, %p39
      %p41 = scmp.ne.s32.totalorder %s33, %s36
      %p42 = scmp.eq.s32.totalorder %s11, 0
      %p43 = por %p41, %p42
      %p44 = scmp.ne.s32.totalorder %s33, %s36
      %p45 = scmp.eq.s32.totalorder %s16, 1
      %p46 = por %p44, %p45
      %p47 = scmp.ne.s32.totalorder %s36, %s37
      %p48 = scmp.eq.s32.totalorder %s16, 0
      %p49 = por %p47, %p48
      %p50 = scmp.ne.s32.totalorder %s36, %s37
      %p51 = scmp.eq.s32.totalorder %s17, 1
      %p52 = por %p50, %p51
      %p54 = scmp.ne.s32.totalorder %s37, %s53
      %p55 = scmp.eq.s32.totalorder %s17, 0
      %p56 = por %p54, %p55
      %s57 = ssub.s32 %s19, %s26
      %p58 = scmp.eq.s32.totalorder %s57, 0
      %s60 = sadd.s32 %s59, 1
      %s61 = scalar_select %p58, %s59, %s60
      %p64 = pneg %p58
      %p65 = scmp.eq.s32.totalorder %s11, 1
      %p66 = por %p64, %p65
      %p67 = scmp.ne.s32.totalorder %s59, %s62
      %p68 = scmp.eq.s32.totalorder %s11, 0
      %p69 = por %p67, %p68
      %p70 = scmp.ne.s32.totalorder %s59, %s62
      %p71 = scmp.eq.s32.totalorder %s16, 1
      %p72 = por %p70, %p71
      %p73 = scmp.ne.s32.totalorder %s62, %s63
      %p74 = scmp.eq.s32.totalorder %s16, 0
      %p75 = por %p73, %p74
      %p76 = scmp.ne.s32.totalorder %s62, %s63
      %p77 = scmp.eq.s32.totalorder %s17, 1
      %p78 = por %p76, %p77
      %p80 = scmp.ne.s32.totalorder %s63, %s79
      %p81 = scmp.eq.s32.totalorder %s17, 0
      %p82 = por %p80, %p81
      %s83 = ssub.s32 %s18, %s30
      %s84 = ssub.s32 %s19, %s26
      %s85 = sor.u32 %s83, %s84
      %p86 = scmp.eq.s32.totalorder %s85, 0
      %s88 = sadd.s32 %s87, 1
      %s89 = scalar_select %p86, %s87, %s88
      %p92 = pneg %p86
      %p93 = scmp.eq.s32.totalorder %s11, 1
      %p94 = por %p92, %p93
      %p95 = scmp.ne.s32.totalorder %s87, %s90
      %p96 = scmp.eq.s32.totalorder %s11, 0
      %p97 = por %p95, %p96
      %p98 = scmp.ne.s32.totalorder %s87, %s90
      %p99 = scmp.eq.s32.totalorder %s16, 1
      %p100 = por %p98, %p99
      %p101 = scmp.ne.s32.totalorder %s90, %s91
      %p102 = scmp.eq.s32.totalorder %s16, 0
      %p103 = por %p101, %p102
      %p104 = scmp.ne.s32.totalorder %s90, %s91
      %p105 = scmp.eq.s32.totalorder %s17, 1
      %p106 = por %p104, %p105
      %p108 = scmp.ne.s32.totalorder %s91, %s107
      %p109 = scmp.eq.s32.totalorder %s17, 0
      %p110 = por %p108, %p109
      %p111 = scmp.le.s32.totalorder 1, %s11
      %p112 = scmp.lt.s32.totalorder %s11, 3
      %p113 = pnand %p111, %p112
      %p114 = pneg %p113
      // Predicated region
      $region9: #{tpu_custom_call.1} parent=5 // pred_check
        _
      $region10: #{tpu_custom_call.1} parent=5 // pred_check_branch
        %116 = sbr.rel (%p113) target = $region12
      $region11: #{tpu_custom_call.1} parent=5 // pred_region
        %s117 = ssub.s32 %s11, 1
        // Predicated region
        $region13: #{tpu_custom_call.1} parent=11 // pred_check
          %p118 = pneg %p75
        $region14: #{tpu_custom_call.1} parent=11 // pred_check_branch
          %120 = sbr.rel (%p118) target = $region16
        $region15: #{tpu_custom_call.1} parent=11 // pred_region
          %s121 = smul.u32 16, %s21
          %p122 = scmp.lt.s32.totalorder %s121, 15
          %s123 = scalar_select %p122, %s121, 15
          %s124 = smul.addr %s123, 8
          %s125 = scalar_lea.vmem %s1, %s124
          %s126 = smul.u32 16, %s21
        $region16: #{tpu_custom_call.1} parent=11 // pred_fallthru
          _
      $region12: #{tpu_custom_call.1} parent=5 // pred_fallthru
        _
      %p127 = scmp.lt.s32.totalorder %s11, 2
      // Predicated region
      $region17: #{tpu_custom_call.1} parent=5 // pred_check
        %p128 = pneg %p127
      $region18: #{tpu_custom_call.1} parent=5 // pred_check_branch
        %130 = sbr.rel (%p128) target = $region20
      $region19: #{tpu_custom_call.1} parent=5 // pred_region
        // Predicated region
        $region21: #{tpu_custom_call.1} parent=19 // pred_check
          %p131 = pneg %p43
        $region22: #{tpu_custom_call.1} parent=19 // pred_check_branch
          %133 = sbr.rel (%p131) target = $region24
        $region23: #{tpu_custom_call.1} parent=19 // pred_region
          %s134 = smul.u32 8, %s18
          %p135 = scmp.lt.s32.totalorder %s134, 15
          %s136 = scalar_select %p135, %s134, 15
          %s137 = smul.addr %s136, 8
          %s138 = scalar_lea.vmem %s0, %s137
          %s139 = smul.u32 8, %s18
        $region24: #{tpu_custom_call.1} parent=19 // pred_fallthru
          _
      $region20: #{tpu_custom_call.1} parent=5 // pred_fallthru
        _
      %p140 = scmp.le.s32.totalorder 1, %s11
      %p141 = scmp.lt.s32.totalorder %s11, 3
      %p142 = pnand %p140, %p141
      %p143 = pneg %p142
      // Predicated region
      $region25: #{tpu_custom_call.1} parent=5 // pred_check
        _
      $region26: #{tpu_custom_call.1} parent=5 // pred_check_branch
        %145 = sbr.rel (%p142) target = $region28
      $region27: #{tpu_custom_call.1} parent=5 // pred_region
        %s146 = ssub.s32 %s11, 1
        %s147 = smul.u32 8, %s20
        %p148 = scmp.lt.s32.totalorder %s147, 15
        %s149 = scalar_select %p148, %s147, 15
        %s150 = smul.addr %s149, 8
        %s151 = scalar_lea.vmem %s0, %s150
        %p152 = pneg %p49
        %p153 = pneg %p46
        %s154 = smul.u32 16, %s21
        %p155 = scmp.lt.s32.totalorder %s154, 15
        %s156 = scalar_select %p155, %s154, 15
        %s157 = smul.addr %s156, 8
        %s158 = scalar_lea.vmem %s1, %s157
        %p159 = pneg %p75
        %p160 = pneg %p72
        %p161 = pneg %p103
        %p162 = pneg %p100
        %s163 = sand.u32 %s90, 1
        %s164 = scalar_lea.sflag [#allocation3], %s163
        %s165 = sand.u32 %s90, 1
        %s166 = smul.addr %s165, 64
        %s167 = scalar_lea.vmem [#allocation2], %s166
        %s168 = smul.u32 8, %s20
        %p169 = scmp.lt.s32.totalorder %s168, 15
        %s170 = scalar_select %p169, %s168, 15
        %s171 = smul.addr %s170, 8
        %s172 = scalar_lea.vmem %s0, %s171
        %s173 = smul.u32 8, %s20
        %s174 = smul.u32 16, %s21
        %p175 = scmp.lt.s32.totalorder %s174, 15
        %s176 = scalar_select %p175, %s174, 15
        %s177 = smul.addr %s176, 8
        %s178 = scalar_lea.vmem %s1, %s177
        %s179 = smul.u32 16, %s21
        %s180 = smul.u32 8, %s20
        %v181 = vld [vmem:[%s172] sm:$0xff]
        %v182 = vld [vmem:[%s172 + $0x8] sm:$0xff]
        %v183 = vld [vmem:[%s172 + $0x10] sm:$0xff]
        %v184 = vld [vmem:[%s172 + $0x18] sm:$0xff]
        %v185 = vld [vmem:[%s172 + $0x20] sm:$0xff]
        %v186 = vld [vmem:[%s172 + $0x28] sm:$0xff]
        %v187 = vld [vmem:[%s172 + $0x30] sm:$0xff]
        %v188 = vld [vmem:[%s172 + $0x38] sm:$0xff]
        %v189 = vld [vmem:[%s178] sm:$0xff]
        %v190 = vld [vmem:[%s178 + $0x8] sm:$0xff]
        %v191 = vld [vmem:[%s178 + $0x10] sm:$0xff]
        %v192 = vld [vmem:[%s178 + $0x18] sm:$0xff]
        %v193 = vld [vmem:[%s178 + $0x20] sm:$0xff]
        %v194 = vld [vmem:[%s178 + $0x28] sm:$0xff]
        %v195 = vld [vmem:[%s178 + $0x30] sm:$0xff]
        %v196 = vld [vmem:[%s178 + $0x38] sm:$0xff]
        %v197 = vld [vmem:[%s178 + $0x40] sm:$0xff]
        %v198 = vld [vmem:[%s178 + $0x48] sm:$0xff]
        %v199 = vld [vmem:[%s178 + $0x50] sm:$0xff]
        %v200 = vld [vmem:[%s178 + $0x58] sm:$0xff]
        %v201 = vld [vmem:[%s178 + $0x60] sm:$0xff]
        %v202 = vld [vmem:[%s178 + $0x68] sm:$0xff]
        %v203 = vld [vmem:[%s178 + $0x70] sm:$0xff]
        %v204 = vld [vmem:[%s178 + $0x78] sm:$0xff]
        %vm205 = vcmask 523264
        %v207 = vsel %vm205, %v181, 0
        %v210 = vsel %vm205, %v182, 0
        %v213 = vsel %vm205, %v183, 0
        %v216 = vsel %vm205, %v184, 0
        %v219 = vsel %vm205, %v185, 0
        %v222 = vsel %vm205, %v186, 0
        %v225 = vsel %vm205, %v187, 0
        %v228 = vsel %vm205, %v188, 0
        %v231 = vsel %vm205, %v189, 0
        %v234 = vsel %vm205, %v190, 0
        %v237 = vsel %vm205, %v191, 0
        %v240 = vsel %vm205, %v192, 0
        %v243 = vsel %vm205, %v193, 0
        %v246 = vsel %vm205, %v194, 0
        %v249 = vsel %vm205, %v195, 0
        %v252 = vsel %vm205, %v196, 0
        %v255 = vsel %vm205, %v197, 0
        %v258 = vsel %vm205, %v198, 0
        %v261 = vsel %vm205, %v199, 0
        %v264 = vsel %vm205, %v200, 0
        %v267 = vsel %vm205, %v201, 0
        %v270 = vsel %vm205, %v202, 0
        %v273 = vsel %vm205, %v203, 0
        %v276 = vsel %vm205, %v204, 0
        %278 = vmatpush.xpose.msra.mxu0 %v276
        %279 = vmatpush.xpose.msra.mxu0 %v273
        %280 = vmatpush.xpose.msra.mxu0 %v270
        %281 = vmatpush.xpose.msra.mxu0 %v267
        %282 = vmatpush.xpose.msra.mxu0 %v264
        %283 = vmatpush.xpose.msra.mxu0 %v261
        %284 = vmatpush.xpose.msra.mxu0 %v258
        %285 = vmatpush.xpose.msra.mxu0 %v255
        %286 = vmatpush.xpose.msra.mxu0 %v252
        %287 = vmatpush.xpose.msra.mxu0 %v249
        %288 = vmatpush.xpose.msra.mxu0 %v246
        %289 = vmatpush.xpose.msra.mxu0 %v243
        %290 = vmatpush.xpose.msra.mxu0 %v240
        %291 = vmatpush.xpose.msra.mxu0 %v237
        %292 = vmatpush.xpose.msra.mxu0 %v234
        %293 = vmatpush.xpose.msra.mxu0 %v231
        %294 = vmatmul.f32.gmra.mxu0 %v207
        %v295 = vpop.f32.mrf.mxu0
        %v296 = vadd.f32 0.0, %v295
        %297 = vmatmul.f32.gmra.mxu0 %v210
        %v298 = vpop.f32.mrf.mxu0
        %v299 = vadd.f32 0.0, %v298
        %300 = vmatmul.f32.gmra.mxu0 %v213
        %v301 = vpop.f32.mrf.mxu0
        %v302 = vadd.f32 0.0, %v301
        %303 = vmatmul.f32.gmra.mxu0 %v216
        %v304 = vpop.f32.mrf.mxu0
        %v305 = vadd.f32 0.0, %v304
        %306 = vmatmul.f32.gmra.mxu0 %v219
        %v307 = vpop.f32.mrf.mxu0
        %v308 = vadd.f32 0.0, %v307
        %309 = vmatmul.f32.gmra.mxu0 %v222
        %v310 = vpop.f32.mrf.mxu0
        %v311 = vadd.f32 0.0, %v310
        %312 = vmatmul.f32.gmra.mxu0 %v225
        %v313 = vpop.f32.mrf.mxu0
        %v314 = vadd.f32 0.0, %v313
        %315 = vmatmul.f32.gmra.mxu0 %v228
        %v316 = vpop.f32.mrf.mxu0
        %v317 = vadd.f32 0.0, %v316
        %318 = vdwg.mxu0
        %319 = vst [vmem:[%s167] sm:$0xff] %v296
        %320 = vst [vmem:[%s167 + $0x8] sm:$0xff] %v299
        %321 = vst [vmem:[%s167 + $0x10] sm:$0xff] %v302
        %322 = vst [vmem:[%s167 + $0x18] sm:$0xff] %v305
        %323 = vst [vmem:[%s167 + $0x20] sm:$0xff] %v308
        %324 = vst [vmem:[%s167 + $0x28] sm:$0xff] %v311
        %325 = vst [vmem:[%s167 + $0x30] sm:$0xff] %v314
        %326 = vst [vmem:[%s167 + $0x38] sm:$0xff] %v317
        %s327 = sand.u32 %s90, 1
        %s328 = scalar_lea.sflag [#allocation3], %s327
        %s329 = sand.u32 %s90, 1
        %s330 = smul.addr %s329, 64
        %s331 = scalar_lea.vmem [#allocation2], %s330
        // Predicated region
        $region29: #{tpu_custom_call.1} parent=27 // pred_check
          %p332 = pneg %p100
        $region30: #{tpu_custom_call.1} parent=27 // pred_check_branch
          %334 = sbr.rel (%p332) target = $region32
        $region31: #{tpu_custom_call.1} parent=27 // pred_region
          %s335 = smul.u32 8, %s20
          %337 = vsyncadd %s328, 0
          %s338 = sadd.s32 %s21, %s335
          %s339 = smul.addr %s338, 8
          %s340 = scalar_lea.hbm %s2, %s339
          %s341 = sshll.u32 %s331, 4
          %s342 = int_to_ptr.vmem [resolvable:$true] %s341
          %s343 = sshll.u32 %s340, 4
          %s344 = int_to_ptr.hbm [resolvable:$true] %s343
          %349 = dma.vmem_to_hbm [thread:$0]  %s342, 1024, %s344, %s328, 128, 128, 8
        $region32: #{tpu_custom_call.1} parent=27 // pred_fallthru
          _
      $region28: #{tpu_custom_call.1} parent=5 // pred_fallthru
        _
      %p350 = scmp.le.s32.totalorder 2, %s11
      // Predicated region
      $region33: #{tpu_custom_call.1} parent=5 // pred_check
        %p351 = pneg %p350
      $region34: #{tpu_custom_call.1} parent=5 // pred_check_branch
        %353 = sbr.rel (%p351) target = $region36
      $region35: #{tpu_custom_call.1} parent=5 // pred_region
        %s354 = ssub.s32 %s11, 2
        // Predicated region
        $region37: #{tpu_custom_call.1} parent=35 // pred_check
          %p355 = pneg %p106
        $region38: #{tpu_custom_call.1} parent=35 // pred_check_branch
          %357 = sbr.rel (%p355) target = $region40
        $region39: #{tpu_custom_call.1} parent=35 // pred_region
          %s358 = sand.u32 %s91, 1
          %s359 = scalar_lea.sflag [#allocation3], %s358
          %s360 = sand.u32 %s91, 1
          %s361 = smul.addr %s360, 64
          %s362 = scalar_lea.vmem [#allocation2], %s361
          %364 = dma.done %s359, 1024
        $region40: #{tpu_custom_call.1} parent=35 // pred_fallthru
          _
      $region36: #{tpu_custom_call.1} parent=5 // pred_fallthru
        _
    $region6: #{tpu_custom_call.1} parent=1 // loop_footer
      %s15 = sadd.s32 1, %s11
    $region7: #{tpu_custom_call.1} parent=1 // loop_footer_branch
      %10 = sbr.rel target = $region3
    $region8: #{tpu_custom_call.1} parent=1 // loop_exit
      _
    %365 = vsyncpa [#allocation3], 1
    %s366 = scalar_lea.sflag [#allocation3], 1
    %367 = vsyncpa %s366, 1

</llo_original>
